<compile_context>
chip_gen: v5e
topology: v5e:2x2
jax: 0.10.0
libtpu: 0.0.40
codegen_flags: <defaults>
</compile_context>

<pallas_src>
import math
import functools

import jax
import jax.numpy as jnp
from jax import lax
from jax.experimental import pallas as pl
from jax.experimental.pallas import tpu as pltpu


def _round_up(v, m):
    return ((v + m - 1) // m) * m


def _fpn_kernel(x_ref, w_ref, b_ref, out_ref, *, num_tau):
    T = num_tau
    x = x_ref[...]                                   # (tm, D) f32
    w = w_ref[...]                                   # (D, T)  f32
    b = b_ref[...]                                   # (1, T)  f32

    # Linear layer: logits = x @ W + b (single MXU pass, f32 accumulate).
    logits = jnp.dot(x, w, preferred_element_type=jnp.float32) + b   # (tm, T)

    # Numerically-stable softmax / log-softmax with a single exp pass (EUP).
    mx = jnp.max(logits, axis=1, keepdims=True)
    shifted = logits - mx
    e = jnp.exp(shifted)                             # one exp over (tm, T)
    s = jnp.sum(e, axis=1, keepdims=True)
    q_probs = e / s                                  # exact divide keeps 1e-5 tol
    q = shifted - jnp.log(s)                         # log-probs

    # taus = cat(zeros, cumsum(q_probs, dim=1)) as one tiny MXU matmul against
    # an in-kernel constant L[i, j] = (i < j), shape (T, T+1); column 0 == 0.
    row = lax.broadcasted_iota(jnp.int32, (T, T + 1), 0)
    col = lax.broadcasted_iota(jnp.int32, (T, T + 1), 1)
    L = (row < col).astype(jnp.float32)
    taus = jnp.dot(q_probs, L, preferred_element_type=jnp.float32)   # (tm, T+1)

    # Midpoints on the VPU:
    #   (taus[:, :-1] + taus[:, 1:]) / 2 == taus[:, :T] + 0.5 * q_probs
    taus_mid = taus[:, :T] + 0.5 * q_probs                           # (tm, T)

    # entropy = -(q * q_probs).sum(-1, keepdim=True)  (reuses q_probs, no exp)
    entropy = -jnp.sum(q * q_probs, axis=1, keepdims=True)           # (tm, 1)

    # Single packed full-tile store: [ taus | taus_mid | entropy ].
    out_ref[...] = jnp.concatenate([taus, taus_mid, entropy], axis=-1)


def _tpu_budgets():
    """(per-x-buffer VMEM budget, explicit vmem_limit cap) by TPU generation."""
    MiB = 1 << 20
    kind = ""
    try:
        kind = jax.devices()[0].device_kind.lower()
    except Exception:
        pass
    if ("v5" in kind and "lite" in kind) or "v5e" in kind:
        return 6 * MiB, 100 * MiB        # v5e: 16 MiB default scoped, 128 MiB phys
    if "v6" in kind:
        return 20 * MiB, 100 * MiB       # v6e: 128 MiB physical VMEM
    if "7" in kind:
        return 10 * MiB, 56 * MiB        # v7x: 64 MiB physical per TC
    return 8 * MiB, 64 * MiB             # safe default


def _pick_tm(b_pad, tm_target):
    """Largest multiple-of-8 divisor of b_pad that is <= tm_target."""
    tm_target = max(8, min(tm_target, b_pad))
    best = 8
    d = 8
    while d <= tm_target:
        if b_pad % d == 0:
            best = d
        d += 8
    return best


def fpn_forward(x, w, b, num_tau):
    """x: (B, layer_size). Returns (taus (B,T+1), taus_ (B,T), entropy (B,1))."""
    B, D = x.shape
    T = num_tau
    OUT_W = 2 * T + 2
    MiB = 1 << 20

    x = x.astype(jnp.float32)
    w = w.astype(jnp.float32)
    b2d = b.reshape(1, T).astype(jnp.float32)

    # Pad batch only to a sublane multiple (<= 7 extra zero rows, no full copy).
    b_pad = _round_up(max(B, 8), 8)
    x_in = jnp.pad(x, ((0, b_pad - B), (0, 0))) if b_pad != B else x

    per_buf, vmem_cap = _tpu_budgets()
    D_pad = _round_up(D, 128)            # lane padding of the x tile in VMEM

    # Batch-tile target from the per-generation VMEM budget (bigger tiles for
    # small D to amortize grid-step overhead), then snapped to a divisor of the
    # padded batch so no tail padding / tail copy is ever needed.
    tm_target = max(8, min((per_buf // (4 * D_pad)) // 8 * 8, 4096))
    tm = _pick_tm(b_pad, tm_target)
    # Guarantee >= 2 grid steps when the batch allows it: enables DMA/compute
    # overlap and lets the "parallel" axis split across v7x's two TensorCores.
    if b_pad // tm < 2 and b_pad >= 16:
        tm = _pick_tm(b_pad, b_pad // 2)
    nb = b_pad // tm

    # Explicit VMEM budget: double-buffered x/out tiles + resident W/bias + margin.
    need = (2 * tm * D_pad * 4                  # x double-buffer
            + 2 * _round_up(D, 8) * 128 * 4     # W (last dim padded to 128 lanes)
            + 2 * 8 * 128 * 4                   # bias
            + 2 * tm * 128 * 4)                 # packed output tile
    vmem_limit = int(min(vmem_cap, max(need + 2 * MiB, 32 * MiB)))

    out = pl.pallas_call(
        functools.partial(_fpn_kernel, num_tau=T),
        out_shape=jax.ShapeDtypeStruct((b_pad, OUT_W), jnp.float32),
        grid=(nb,),
        in_specs=[
            pl.BlockSpec((tm, D), lambda i: (i, 0)),      # x: tiled over batch
            pl.BlockSpec((D, T), lambda i: (0, 0)),       # W: resident
            pl.BlockSpec((1, T), lambda i: (0, 0)),       # b: resident
        ],
        out_specs=pl.BlockSpec((tm, OUT_W), lambda i: (i, 0)),
        compiler_params=pltpu.CompilerParams(
            dimension_semantics=("parallel",),
            vmem_limit_bytes=vmem_limit),
    )(x_in, w, b2d)

    taus = out[:B, : T + 1]
    taus_ = out[:B, T + 1 : 2 * T + 1]
    entropy = out[:B, 2 * T + 1 :]
    return taus, taus_, entropy


def init_fpn_params(key, layer_size, num_tau):
    """Xavier-uniform weight (gain=0.01) + default-torch-style bias init."""
    kw, kb = jax.random.split(key)
    fan_in, fan_out = layer_size, num_tau
    gain = 0.01
    bound_w = gain * math.sqrt(6.0 / (fan_in + fan_out))
    # Stored as (layer_size, num_tau) so the kernel computes x @ W.
    w = jax.random.uniform(kw, (layer_size, num_tau), jnp.float32,
                           minval=-bound_w, maxval=bound_w)
    bound_b = 1.0 / math.sqrt(fan_in)
    b = jax.random.uniform(kb, (num_tau,), jnp.float32,
                           minval=-bound_b, maxval=bound_b)
    return w, b


def fpn_reference(x, w, b):
    """Pure-JAX reference mirroring the PyTorch forward."""
    logits = x @ w + b
    q = jax.nn.log_softmax(logits, axis=1)
    q_probs = jnp.exp(q)
    taus = jnp.cumsum(q_probs, axis=1)
    taus = jnp.concatenate([jnp.zeros((q.shape[0], 1), jnp.float32), taus], axis=1)
    taus_ = (taus[:, :-1] + taus[:, 1:]) / 2.0
    entropy = -(q * q_probs).sum(axis=-1, keepdims=True)
    return taus, taus_, entropy


if __name__ == "__main__":
    batch = 2
    layer_size = 32
    num_tau = 8

    key = jax.random.PRNGKey(0)
    k_x, k_p = jax.random.split(key)
    x = jax.random.normal(k_x, (batch, layer_size), jnp.float32)
    w, b = init_fpn_params(k_p, layer_size, num_tau)

    taus, taus_, entropy = fpn_forward(x, w, b, num_tau)
    jax.block_until_ready((taus, taus_, entropy))

    # Sanity check against the pure-JAX reference.
    r_taus, r_taus_, r_ent = fpn_reference(x, w, b)
    assert taus.shape == (batch, num_tau + 1)
    assert taus_.shape == (batch, num_tau)
    assert entropy.shape == (batch, 1)
    assert jnp.allclose(taus, r_taus, atol=1e-5)
    assert jnp.allclose(taus_, r_taus_, atol=1e-5)
    assert jnp.allclose(entropy, r_ent, atol=1e-5)

    print("KERNEL_OK")
</pallas_src>

<mosaic_0001>
module attributes {stable_mosaic.version = 11 : i64} {
  func.func @_fpn_kernel(%arg0: i32, %arg1: memref<8x32xf32, #tpu.memory_space<vmem>>, %arg2: memref<32x8xf32, #tpu.memory_space<vmem>>, %arg3: memref<1x8xf32, #tpu.memory_space<vmem>>, %arg4: memref<8x18xf32, #tpu.memory_space<vmem>>) attributes {dimension_semantics = [#tpu.dimension_semantics<parallel>], iteration_bounds = array<i64: 1>, scalar_prefetch = 0 : i64, scratch_operands = 0 : i64, tpu.core_type = #tpu.core_type<tc>, window_params = [{transform_indices = @transform_0, window_bounds = array<i64: 8, 32>}, {pipeline_mode = #tpu.pipeline_mode<synchronous>, transform_indices = @transform_1, window_bounds = array<i64: 32, 8>}, {pipeline_mode = #tpu.pipeline_mode<synchronous>, transform_indices = @transform_2, window_bounds = array<i64: 1, 8>}, {transform_indices = @transform_3, window_bounds = array<i64: 8, 18>}]} {
    %c0 = arith.constant 0 : index
    %c0_0 = arith.constant 0 : index
    %0 = vector.load %arg1[%c0, %c0_0] : memref<8x32xf32, #tpu.memory_space<vmem>>, vector<8x32xf32>
    %c0_1 = arith.constant 0 : index
    %c0_2 = arith.constant 0 : index
    %1 = vector.load %arg2[%c0_1, %c0_2] : memref<32x8xf32, #tpu.memory_space<vmem>>, vector<32x8xf32>
    %c0_3 = arith.constant 0 : index
    %c0_4 = arith.constant 0 : index
    %2 = vector.load %arg3[%c0_3, %c0_4] : memref<1x8xf32, #tpu.memory_space<vmem>>, vector<1x8xf32>
    %cst = arith.constant dense<0.000000e+00> : vector<8x8xf32>
    %3 = tpu.matmul %0, %1, %cst {dimension_numbers = #tpu.dot_dimension_numbers<[1], [0], [0], [1], [0, 0, 1, 1], [], []>} : vector<8x32xf32>, vector<32x8xf32>, vector<8x8xf32> -> vector<8x8xf32>
    %4 = vector.broadcast %2 : vector<1x8xf32> to vector<8x8xf32>
    %5 = arith.addf %3, %4 : vector<8x8xf32>
    %cst_5 = arith.constant dense<0xFF800000> : vector<8xf32>
    %6 = vector.multi_reduction <maximumf>, %5, %cst_5 [1] : vector<8x8xf32> to vector<8xf32>
    %7 = vector.shape_cast %6 : vector<8xf32> to vector<8x1xf32>
    %8 = vector.broadcast %7 : vector<8x1xf32> to vector<8x8xf32>
    %9 = arith.subf %5, %8 : vector<8x8xf32>
    %10 = math.exp %9 : vector<8x8xf32>
    %cst_6 = arith.constant dense<0.000000e+00> : vector<8xf32>
    %11 = vector.multi_reduction <add>, %10, %cst_6 [1] : vector<8x8xf32> to vector<8xf32>
    %12 = vector.shape_cast %11 : vector<8xf32> to vector<8x1xf32>
    %13 = vector.broadcast %12 : vector<8x1xf32> to vector<8x8xf32>
    %14 = arith.divf %10, %13 : vector<8x8xf32>
    %15 = math.log %12 : vector<8x1xf32>
    %16 = vector.broadcast %15 : vector<8x1xf32> to vector<8x8xf32>
    %17 = arith.subf %9, %16 : vector<8x8xf32>
    %18 = tpu.iota {dimensions = array<i32: 0>} : vector<8x9xi32>
    %19 = tpu.iota {dimensions = array<i32: 1>} : vector<8x9xi32>
    %20 = arith.cmpi slt, %18, %19 : vector<8x9xi32>
    %21 = arith.extui %20 : vector<8x9xi1> to vector<8x9xi32>
    %22 = arith.sitofp %21 : vector<8x9xi32> to vector<8x9xf32>
    %cst_7 = arith.constant dense<0.000000e+00> : vector<8x9xf32>
    %23 = tpu.matmul %14, %22, %cst_7 {dimension_numbers = #tpu.dot_dimension_numbers<[1], [0], [0], [1], [0, 0, 1, 1], [], []>} : vector<8x8xf32>, vector<8x9xf32>, vector<8x9xf32> -> vector<8x9xf32>
    %24 = vector.extract_strided_slice %23 {offsets = [0, 0], sizes = [8, 8], strides = [1, 1]} : vector<8x9xf32> to vector<8x8xf32>
    %cst_8 = arith.constant 5.000000e-01 : f32
    %25 = vector.broadcast %cst_8 : f32 to vector<8x8xf32>
    %26 = arith.mulf %25, %14 : vector<8x8xf32>
    %27 = arith.addf %24, %26 : vector<8x8xf32>
    %28 = arith.mulf %17, %14 : vector<8x8xf32>
    %cst_9 = arith.constant dense<0.000000e+00> : vector<8xf32>
    %29 = vector.multi_reduction <add>, %28, %cst_9 [1] : vector<8x8xf32> to vector<8xf32>
    %30 = vector.shape_cast %29 : vector<8xf32> to vector<8x1xf32>
    %cst_10 = arith.constant 0.000000e+00 : f32
    %31 = vector.broadcast %cst_10 : f32 to vector<8x1xf32>
    %32 = arith.subf %31, %30 : vector<8x1xf32>
    %33 = tpu.concatenate %23, %27, %32 in 1 : vector<8x9xf32>, vector<8x8xf32>, vector<8x1xf32> -> vector<8x18xf32>
    %c0_11 = arith.constant 0 : index
    %c0_12 = arith.constant 0 : index
    %34 = vector.load %arg4[%c0_11, %c0_12] : memref<8x18xf32, #tpu.memory_space<vmem>>, vector<8x18xf32>
    tpu.vector_store %arg4[%c0_11, %c0_12], %33 {strides = array<i32>} : memref<8x18xf32, #tpu.memory_space<vmem>>, vector<8x18xf32>,
    return
  }
  func.func @transform_0(%arg0: i32) -> (i32, i32) {
    %c0_i32 = arith.constant 0 : i32
    %c0_i32_0 = arith.constant 0 : i32
    return %arg0, %c0_i32 : i32, i32
  }
  func.func @transform_1(%arg0: i32) -> (i32, i32) {
    %c0_i32 = arith.constant 0 : i32
    %c0_i32_0 = arith.constant 0 : i32
    %c0_i32_1 = arith.constant 0 : i32
    return %c0_i32, %c0_i32_0 : i32, i32
  }
  func.func @transform_2(%arg0: i32) -> (i32, i32) {
    %c0_i32 = arith.constant 0 : i32
    %c0_i32_0 = arith.constant 0 : i32
    %c0_i32_1 = arith.constant 0 : i32
    return %c0_i32, %c0_i32_0 : i32, i32
  }
  func.func @transform_3(%arg0: i32) -> (i32, i32) {
    %c0_i32 = arith.constant 0 : i32
    %c0_i32_0 = arith.constant 0 : i32
    return %arg0, %c0_i32 : i32, i32
  }
}

</mosaic_0001>

<llo_original>
// kernel: tpu_custom_call.1
$region0: #{tpu_custom_call.1}
  #allocation0 [shape = 'u32[]', space=smem, size = 0x4, offset = 0x4, fixed_abs, tag = 'smem constant byte address 0x4 - core index']
  #allocation1 [shape = 'u32[72,128]{1,0:T(1,128)}', space=vmem, size = 0x9000, scoped, tag = 'internal scratch']
  %s0 = inlined_call_operand.vmem [shape: f32[8,32], index: 0, kind: input, shape index: {}]
  %s1 = inlined_call_operand.vmem [shape: f32[32,8], index: 1, kind: input, shape index: {}]
  %s2 = inlined_call_operand.vmem [shape: f32[1,8], index: 2, kind: input, shape index: {}]
  %s3 = inlined_call_operand.hbm [shape: f32[8,18], index: 3, kind: output, shape index: {}]
  %s4 = sld [smem:[#allocation0]]
  $region22: #{tpu_custom_call.1} parent=0
    _
  %s6 = ssub.s32 1, %s4
  %s7 = scalar_select 0, %s6, %s4
  $region1: #{tpu_custom_call.1} parent=0
    #allocation2 [shape = 'u8[4096]{0}', space=vmem, size = 0x1000, scoped, tag = 'output window, operand 0, single buffered']
    #allocation3 [shape = 's32[1]{0}', space=sflag, size = 0x4, scoped, tag = 'scoped memory for tpu_custom_call.1']
    %8 = vsyncpa [#allocation3], 0
    // Predicated region
    $region2: #{tpu_custom_call.1} parent=1 // pred_check
      _
    $region3: #{tpu_custom_call.1} parent=1 // pred_check_branch
      %10 = sbr.rel (0) target = $region5
    $region4: #{tpu_custom_call.1} parent=1 // pred_region
      _
    $region5: #{tpu_custom_call.1} parent=1 // pred_fallthru
      _
    // Predicated region
    $region6: #{tpu_custom_call.1} parent=1 // pred_check
      _
    $region7: #{tpu_custom_call.1} parent=1 // pred_check_branch
      %12 = sbr.rel (0) target = $region9
    $region8: #{tpu_custom_call.1} parent=1 // pred_region
      _
    $region9: #{tpu_custom_call.1} parent=1 // pred_fallthru
      _
    // Predicated region
    $region10: #{tpu_custom_call.1} parent=1 // pred_check
      _
    $region11: #{tpu_custom_call.1} parent=1 // pred_check_branch
      %14 = sbr.rel (0) target = $region13
    $region12: #{tpu_custom_call.1} parent=1 // pred_region
      _
    $region13: #{tpu_custom_call.1} parent=1 // pred_fallthru
      _
    %v15 = vld [vmem:[%s0] sm:$0xff]
    %v16 = vld [vmem:[%s1] sm:$0xff]
    %v17 = vld [vmem:[%s1 + $0x8] sm:$0xff]
    %v18 = vld [vmem:[%s1 + $0x10] sm:$0xff]
    %v19 = vld [vmem:[%s1 + $0x18] sm:$0xff]
    %v20 = vld [vmem:[%s2] sm:$0x1]
    %v22 = vperm.slane %v20, 0
    %vm24 = vcmask 261120
    %v26 = vsel %vm24, %v15, 0
    %28 = vmatpush.msra.mxu0 0.0
    %29 = vmatpush.msra.mxu0 0.0
    %30 = vmatpush.msra.mxu0 0.0
    %31 = vmatpush.msra.mxu0 0.0
    %32 = vmatpush.msra.mxu0 0.0
    %33 = vmatpush.msra.mxu0 0.0
    %34 = vmatpush.msra.mxu0 0.0
    %35 = vmatpush.msra.mxu0 0.0
    %36 = vmatpush.msra.mxu0 0.0
    %37 = vmatpush.msra.mxu0 0.0
    %38 = vmatpush.msra.mxu0 0.0
    %39 = vmatpush.msra.mxu0 0.0
    %40 = vmatpush.msra.mxu0 %v19
    %41 = vmatpush.msra.mxu0 %v18
    %42 = vmatpush.msra.mxu0 %v17
    %43 = vmatpush.msra.mxu0 %v16
    %44 = vmatmul.f32.gmra.mxu0 %v26
    %v45 = vpop.f32.mrf.mxu0
    %v46 = vadd.f32 %v22, %v45
    %47 = vdwg.mxu0
    %vm48 = vcmask 64512
    %v49 = vsel %vm48, %v46, -inf
    %50 = vmax.xlane.f32.xlu0 %v49
    %v51 = vpop.xlane.xlu0 %50
    %v52 = vsub.f32 %v46, %v51
    %v53 = vmul.f32 %v52, 1.442695
    %v54 = vpow.pop %v53
    %v55 = vsel %vm48, %v54, 0.0
    %56 = vadd.xlane.f32.xlu0 %v55
    %v57 = vpop.xlane.xlu0 %56
    %v58 = vrcp.pop %v57
    %v59 = vmul.f32 %v57, %v58
    %v60 = vsub.f32 1.0, %v59
    %v61 = vmul.f32 %v58, %v60
    %v62 = vadd.f32 %v58, %v61
    %vm63 = vweird.f32 %v57
    %vm64 = vweird.f32 %v58
    %vm65 = vmor %vm63, %vm64
    %v66 = vsel %vm65, %v58, %v62
    %v67 = vand.u32 2147483647, %v57
    %vm68 = vcmp.eq.f32.partialorder %v67, 8.507059e+37
    %v69 = vand.u32 %v57, 2147483648
    %v70 = vor.u32 1.1754944e-38, %v69
    %v71 = vsel %vm68, %v70, %v66
    %v72 = vmul.f32 %v54, %v71
    %v73 = vlog2.pop %v57
    %v74 = vmul.f32 %v73, 0.6931472
    %v75 = vsub.f32 %v52, %v74
    %v76 = vlaneseq
    %v77 = vshrl.u32 %v76, 7
    %v78 = vlaneseq
    %v79 = vand.u32 %v78, 127
    %vm80 = vcmp.lt.s32.totalorder %v77, %v79
    %v81 = vsel %vm80, 1, 0
    %v82 = vcvt.s32.f32 %v81
    %v84 = vsel %vm48, %v72, 0
    %86 = vmatpush.msra.mxu0 0.0
    %87 = vmatpush.msra.mxu0 0.0
    %88 = vmatpush.msra.mxu0 0.0
    %89 = vmatpush.msra.mxu0 0.0
    %90 = vmatpush.msra.mxu0 0.0
    %91 = vmatpush.msra.mxu0 0.0
    %92 = vmatpush.msra.mxu0 0.0
    %93 = vmatpush.msra.mxu0 0.0
    %94 = vmatpush.msra.mxu0 0.0
    %95 = vmatpush.msra.mxu0 0.0
    %96 = vmatpush.msra.mxu0 0.0
    %97 = vmatpush.msra.mxu0 0.0
    %98 = vmatpush.msra.mxu0 0.0
    %99 = vmatpush.msra.mxu0 0.0
    %100 = vmatpush.msra.mxu0 0.0
    %101 = vmatpush.msra.mxu0 %v82
    %102 = vmatmul.f32.gmra.mxu0 %v84
    %v103 = vpop.f32.mrf.mxu0
    %v104 = vadd.f32 0.0, %v103
    %105 = vdwg.mxu0
    %v106 = vmul.f32 %v72, 0.5
    %v107 = vadd.f32 %v104, %v106
    %v108 = vmul.f32 %v75, %v72
    %v109 = vsel %vm48, %v108, 0.0
    %110 = vadd.xlane.f32.xlu0 %v109
    %v111 = vpop.xlane.xlu0 %110
    %v112 = vsub.f32 0.0, %v111
    %114 = vrot.lane.b32.xlu0 %v107, 9
    %v115 = vpop.permute.xlu0 %114
    %vm117 = vcmask 72704
    %v118 = vsel %vm117, %v104, %v115
    %vm119 = vcmask 138240
    %v120 = vsel %vm119, %v118, %v112
    %vm121 = vcmask 146432
    %122 = vst.msk [vmem:[#allocation2] sm:$0xff] %vm121, %v120
    // Predicated region
    $region14: #{tpu_custom_call.1} parent=1 // pred_check
      _
    $region15: #{tpu_custom_call.1} parent=1 // pred_check_branch
      %124 = sbr.rel (0) target = $region17
    $region16: #{tpu_custom_call.1} parent=1 // pred_region
      %126 = vsyncadd [#allocation3], 0
      %s128 = sshll.u32 [#allocation2], 4
      %s129 = int_to_ptr.vmem [resolvable:$true] %s128
      %s130 = sshll.u32 %s3, 4
      %s131 = int_to_ptr.hbm [resolvable:$true] %s130
      %133 = dma.vmem_to_hbm [thread:$0]  %s129, 128, %s131, [#allocation3]
    $region17: #{tpu_custom_call.1} parent=1 // pred_fallthru
      _
    // Predicated region
    $region18: #{tpu_custom_call.1} parent=1 // pred_check
      _
    $region19: #{tpu_custom_call.1} parent=1 // pred_check_branch
      %135 = sbr.rel (0) target = $region21
    $region20: #{tpu_custom_call.1} parent=1 // pred_region
      %137 = dma.done [#allocation3], 128
    $region21: #{tpu_custom_call.1} parent=1 // pred_fallthru
      _
    %138 = vsyncpa [#allocation3], 1

</llo_original>
